<compile_context>
chip_gen: v5e
topology: v5e:2x2
jax: 0.10.0
libtpu: 0.0.40
codegen_flags: <defaults>
</compile_context>

<pallas_src>
import functools

import jax
import jax.numpy as jnp
from jax.experimental import pallas as pl
from jax.experimental.pallas import tpu as pltpu


def _round_up(x, mult):
    return ((x + mult - 1) // mult) * mult


# ----------------------------------------------------------------------------
# Fused kernel: one grid step == one input branch, full depth of the MLP.
# ----------------------------------------------------------------------------
def _fused_equivariant_mlp_kernel(u_ref, v_ref, w1t_ref, w2t_ref,
                                  wu_ref, wv_ref, uo_ref, vo_ref,
                                  *, B, r, n_hidden_layers):
    """Shapes (per branch / grid step):
         u_ref, v_ref   : [1, B*r, Kpad]   folded batch, zero-padded feature dim
         w1t_ref/w2t_ref: [1, Kpad, H]     pre-transposed, zero-padded
         wu_ref/wv_ref  : [1, NL, H, H]    pre-transposed hidden-layer weights
         uo_ref/vo_ref  : [1, B*r, H]      lane-dense outputs
    """
    BR = uo_ref.shape[1]
    H = uo_ref.shape[2]

    # --- First equivariant linear layer (per branch): x @ W^T form ---------
    u = jnp.dot(u_ref[0], w1t_ref[0], preferred_element_type=jnp.float32)  # [BR, H]
    v = jnp.dot(v_ref[0], w2t_ref[0], preferred_element_type=jnp.float32)

    # --- Hidden layers: GLNonlin gating + equivariant matmul, in-VMEM ------
    for i in range(n_hidden_layers):
        u3 = u.reshape(B, r, H)                       # r == 8 -> layout-free split
        v3 = v.reshape(B, r, H)

        # sum_j v[b, j, k]  /  sum_h u[b, h, k]   (lane reductions)
        s_v = jnp.sum(v3, axis=2, keepdims=True)      # [B, r, 1]
        s_u = jnp.sum(u3, axis=2, keepdims=True)

        # to_norm.sum(dim=3)[b, h] = sum_k u[b,h,k] * (sum_j v[b,j,k])
        # -> sublane segment-sum over the r rows of each sample (no bd matmul)
        gl = jnp.sum(u3 * s_v, axis=1, keepdims=True)  # [B, 1, H]
        gr = jnp.sum(v3 * s_u, axis=1, keepdims=True)

        # relu(sign(x)) == 1 where x > 0 else 0  -> gate rows to zero.
        # TODO(synk): NaN gate inputs zero out here but propagate NaN in torch.
        u_g = jnp.where(gl > 0, u3, 0.0).reshape(BR, H)
        v_g = jnp.where(gr > 0, v3, 0.0).reshape(BR, H)

        u = jnp.dot(u_g, wu_ref[0, i], preferred_element_type=jnp.float32)
        v = jnp.dot(v_g, wv_ref[0, i], preferred_element_type=jnp.float32)

    uo_ref[0] = u.astype(uo_ref.dtype)
    vo_ref[0] = v.astype(vo_ref.dtype)


# ----------------------------------------------------------------------------
# Wrapper: layout plumbing + single pallas_call
# ----------------------------------------------------------------------------
def _equivariant_mlp_forward_impl(uvs, w1_list, w2_list, layers_u, layers_v):
    L = len(uvs)
    B, _, r = uvs[0][0].shape
    H = w1_list[0].shape[0]
    NL = int(layers_u.shape[0])        # n_layers - 1 hidden layers
    BR = B * r

    Kpad = _round_up(max([u.shape[1] for u, _ in uvs] +
                         [v.shape[1] for _, v in uvs]), 8)

    def fold_pad(x):
        # [B, K, r] -> folded [B*r, Kpad], row b*r+k holds sample b, rank col k
        K = x.shape[1]
        xf = x.transpose(0, 2, 1).reshape(BR, K)
        return jnp.pad(xf, ((0, 0), (0, Kpad - K)))

    def pad_w_t(w):
        # [H, K] -> zero-pad K and transpose -> [Kpad, H]  (kernel does x @ W^T)
        K = w.shape[1]
        return jnp.pad(w, ((0, 0), (0, Kpad - K))).T

    u_f = jnp.stack([fold_pad(u) for u, _ in uvs], axis=0)        # [L, BR, Kpad]
    v_f = jnp.stack([fold_pad(v) for _, v in uvs], axis=0)
    w1t = jnp.stack([pad_w_t(w) for w in w1_list], axis=0)        # [L, Kpad, H]
    w2t = jnp.stack([pad_w_t(w) for w in w2_list], axis=0)

    if NL > 0:
        # [NL, L, H, H] -> [L, NL, H, H], pre-transposed (hoisted, once per fwd)
        wu_t = jnp.transpose(layers_u, (1, 0, 3, 2))
        wv_t = jnp.transpose(layers_v, (1, 0, 3, 2))
        NLb = NL
    else:
        wu_t = jnp.zeros((L, 1, H, H), u_f.dtype)
        wv_t = jnp.zeros((L, 1, H, H), v_f.dtype)
        NLb = 1

    kernel = functools.partial(_fused_equivariant_mlp_kernel,
                               B=B, r=r, n_hidden_layers=NL)

    flops = L * (4 * BR * Kpad * H + NL * (4 * BR * H * H + 6 * BR * H))
    bytes_accessed = 4 * (2 * L * BR * Kpad + 2 * L * Kpad * H
                          + 2 * L * NLb * H * H + 2 * L * BR * H)

    uo, vo = pl.pallas_call(
        kernel,
        out_shape=(jax.ShapeDtypeStruct((L, BR, H), u_f.dtype),
                   jax.ShapeDtypeStruct((L, BR, H), v_f.dtype)),
        grid_spec=pltpu.PrefetchScalarGridSpec(
            num_scalar_prefetch=0,
            grid=(L,),
            in_specs=[
                pl.BlockSpec((1, BR, Kpad), lambda l: (l, 0, 0)),
                pl.BlockSpec((1, BR, Kpad), lambda l: (l, 0, 0)),
                pl.BlockSpec((1, Kpad, H), lambda l: (l, 0, 0)),
                pl.BlockSpec((1, Kpad, H), lambda l: (l, 0, 0)),
                pl.BlockSpec((1, NLb, H, H), lambda l: (l, 0, 0, 0)),
                pl.BlockSpec((1, NLb, H, H), lambda l: (l, 0, 0, 0)),
            ],
            out_specs=[
                pl.BlockSpec((1, BR, H), lambda l: (l, 0, 0)),
                pl.BlockSpec((1, BR, H), lambda l: (l, 0, 0)),
            ],
        ),
        compiler_params=pltpu.CompilerParams(
            dimension_semantics=("parallel",)),       # branches -> v7x's 2 TCs
        cost_estimate=pl.CostEstimate(flops=flops, transcendentals=0,
                                      bytes_accessed=bytes_accessed),
    )(u_f, v_f, w1t, w2t, wu_t, wv_t)

    # Unfold back to the module's per-branch [B, hidden, r] layout.
    us_out = uo.reshape(L, B, r, H).transpose(0, 1, 3, 2)
    vs_out = vo.reshape(L, B, r, H).transpose(0, 1, 3, 2)
    return [(us_out[j], vs_out[j]) for j in range(L)]


equivariant_mlp_forward = jax.jit(_equivariant_mlp_forward_impl)


# ----------------------------------------------------------------------------
# Pure-JAX reference (transcription of the PyTorch EquivariantMLP.forward)
# ----------------------------------------------------------------------------
def reference_forward(uvs, w1_list, w2_list, layers_u, layers_v):
    hidden = w1_list[0].shape[0]
    new_list = []
    for j, (u, v) in enumerate(uvs):
        out = jnp.concatenate(
            [jnp.einsum("hn,bnr->bhr", w1_list[j], u),
             jnp.einsum("hm,bmr->bhr", w2_list[j], v)], axis=1)
        new_list.append((out[:, :hidden], out[:, hidden:]))
    us = jnp.stack([t[0] for t in new_list], axis=1)   # [B, L, H, r]
    vs = jnp.stack([t[1] for t in new_list], axis=1)
    for i in range(layers_u.shape[0]):
        to_norm = jnp.einsum("blhr,bljr->blhj", us, vs)
        left = jax.nn.relu(jnp.sign(jnp.sum(to_norm, axis=3)))[..., None]
        right = jax.nn.relu(jnp.sign(jnp.sum(to_norm, axis=2)))[..., None]
        us = jnp.einsum("lij,bljr->blir", layers_u[i], left * us)
        vs = jnp.einsum("lij,bljr->blir", layers_v[i], right * vs)
    return [(us[:, j], vs[:, j]) for j in range(us.shape[1])]


if __name__ == "__main__":
    B, r = 2, 8
    hidden_dim = 128          # lane-dense hidden axis
    n_layers = 3
    n_list = [16, 24]
    m_list = [24, 16]
    L = len(n_list)           # n_input_layers

    key = jax.random.PRNGKey(0)
    keys = iter(jax.random.split(key, 2 * L + 2 * L + 2))

    uvs = []
    for n, m in zip(n_list, m_list):
        u = jax.random.normal(next(keys), (B, n, r), jnp.float32)
        v = jax.random.normal(next(keys), (B, m, r), jnp.float32)
        uvs.append((u, v))

    w1_list = [jax.random.normal(next(keys), (hidden_dim, n), jnp.float32) / n ** 0.5
               for n in n_list]
    w2_list = [jax.random.normal(next(keys), (hidden_dim, m), jnp.float32) / m ** 0.5
               for m in m_list]
    layers_u = (jax.random.normal(next(keys),
                                  (n_layers - 1, L, hidden_dim, hidden_dim),
                                  jnp.float32) / hidden_dim ** 0.5)
    layers_v = (jax.random.normal(next(keys),
                                  (n_layers - 1, L, hidden_dim, hidden_dim),
                                  jnp.float32) / hidden_dim ** 0.5)

    out = equivariant_mlp_forward(uvs, w1_list, w2_list, layers_u, layers_v)
    out = jax.block_until_ready(out)

    ref = reference_forward(uvs, w1_list, w2_list, layers_u, layers_v)
    for j in range(L):
        assert out[j][0].shape == (B, hidden_dim, r)
        assert out[j][1].shape == (B, hidden_dim, r)
        assert jnp.allclose(out[j][0], ref[j][0], atol=2e-3, rtol=2e-3), \
            f"u mismatch at branch {j}"
        assert jnp.allclose(out[j][1], ref[j][1], atol=2e-3, rtol=2e-3), \
            f"v mismatch at branch {j}"

    print("KERNEL_OK")
</pallas_src>

<mosaic_0001>
module attributes {stable_mosaic.version = 11 : i64} {
  func.func @_fused_equivariant_mlp_kernel(%arg0: i32, %arg1: memref<1x16x24xf32, #tpu.memory_space<vmem>>, %arg2: memref<1x16x24xf32, #tpu.memory_space<vmem>>, %arg3: memref<1x24x128xf32, #tpu.memory_space<vmem>>, %arg4: memref<1x24x128xf32, #tpu.memory_space<vmem>>, %arg5: memref<1x2x128x128xf32, #tpu.memory_space<vmem>>, %arg6: memref<1x2x128x128xf32, #tpu.memory_space<vmem>>, %arg7: memref<1x16x128xf32, #tpu.memory_space<vmem>>, %arg8: memref<1x16x128xf32, #tpu.memory_space<vmem>>) attributes {dimension_semantics = [#tpu.dimension_semantics<parallel>], iteration_bounds = array<i64: 2>, scalar_prefetch = 0 : i64, scratch_operands = 0 : i64, tpu.core_type = #tpu.core_type<tc>, window_params = [{transform_indices = @transform_0, window_bounds = array<i64: 1, 16, 24>}, {transform_indices = @transform_1, window_bounds = array<i64: 1, 16, 24>}, {transform_indices = @transform_2, window_bounds = array<i64: 1, 24, 128>}, {transform_indices = @transform_3, window_bounds = array<i64: 1, 24, 128>}, {transform_indices = @transform_4, window_bounds = array<i64: 1, 2, 128, 128>}, {transform_indices = @transform_5, window_bounds = array<i64: 1, 2, 128, 128>}, {transform_indices = @transform_6, window_bounds = array<i64: 1, 16, 128>}, {transform_indices = @transform_7, window_bounds = array<i64: 1, 16, 128>}]} {
    %c0 = arith.constant 0 : index
    %c0_0 = arith.constant 0 : index
    %c0_1 = arith.constant 0 : index
    %0 = vector.load %arg1[%c0, %c0_0, %c0_1] : memref<1x16x24xf32, #tpu.memory_space<vmem>>, vector<1x16x24xf32>
    %1 = vector.shape_cast %0 : vector<1x16x24xf32> to vector<16x24xf32>
    %c0_2 = arith.constant 0 : index
    %c0_3 = arith.constant 0 : index
    %c0_4 = arith.constant 0 : index
    %2 = vector.load %arg3[%c0_2, %c0_3, %c0_4] : memref<1x24x128xf32, #tpu.memory_space<vmem>>, vector<1x24x128xf32>
    %3 = vector.shape_cast %2 : vector<1x24x128xf32> to vector<24x128xf32>
    %cst = arith.constant dense<0.000000e+00> : vector<16x128xf32>
    %4 = tpu.matmul %1, %3, %cst {dimension_numbers = #tpu.dot_dimension_numbers<[1], [0], [0], [1], [0, 0, 1, 1], [], []>} : vector<16x24xf32>, vector<24x128xf32>, vector<16x128xf32> -> vector<16x128xf32>
    %c0_5 = arith.constant 0 : index
    %c0_6 = arith.constant 0 : index
    %c0_7 = arith.constant 0 : index
    %5 = vector.load %arg2[%c0_5, %c0_6, %c0_7] : memref<1x16x24xf32, #tpu.memory_space<vmem>>, vector<1x16x24xf32>
    %6 = vector.shape_cast %5 : vector<1x16x24xf32> to vector<16x24xf32>
    %c0_8 = arith.constant 0 : index
    %c0_9 = arith.constant 0 : index
    %c0_10 = arith.constant 0 : index
    %7 = vector.load %arg4[%c0_8, %c0_9, %c0_10] : memref<1x24x128xf32, #tpu.memory_space<vmem>>, vector<1x24x128xf32>
    %8 = vector.shape_cast %7 : vector<1x24x128xf32> to vector<24x128xf32>
    %cst_11 = arith.constant dense<0.000000e+00> : vector<16x128xf32>
    %9 = tpu.matmul %6, %8, %cst_11 {dimension_numbers = #tpu.dot_dimension_numbers<[1], [0], [0], [1], [0, 0, 1, 1], [], []>} : vector<16x24xf32>, vector<24x128xf32>, vector<16x128xf32> -> vector<16x128xf32>
    %10 = vector.shape_cast %4 : vector<16x128xf32> to vector<2x8x128xf32>
    %11 = vector.shape_cast %9 : vector<16x128xf32> to vector<2x8x128xf32>
    %cst_12 = arith.constant dense<0.000000e+00> : vector<2x8xf32>
    %12 = vector.multi_reduction <add>, %11, %cst_12 [2] : vector<2x8x128xf32> to vector<2x8xf32>
    %13 = vector.shape_cast %12 : vector<2x8xf32> to vector<2x8x1xf32>
    %cst_13 = arith.constant dense<0.000000e+00> : vector<2x8xf32>
    %14 = vector.multi_reduction <add>, %10, %cst_13 [2] : vector<2x8x128xf32> to vector<2x8xf32>
    %15 = vector.shape_cast %14 : vector<2x8xf32> to vector<2x8x1xf32>
    %16 = vector.broadcast %13 : vector<2x8x1xf32> to vector<2x8x128xf32>
    %17 = arith.mulf %10, %16 : vector<2x8x128xf32>
    %cst_14 = arith.constant dense<0.000000e+00> : vector<2x128xf32>
    %18 = vector.multi_reduction <add>, %17, %cst_14 [1] : vector<2x8x128xf32> to vector<2x128xf32>
    %19 = vector.shape_cast %18 : vector<2x128xf32> to vector<2x1x128xf32>
    %20 = vector.broadcast %15 : vector<2x8x1xf32> to vector<2x8x128xf32>
    %21 = arith.mulf %11, %20 : vector<2x8x128xf32>
    %cst_15 = arith.constant dense<0.000000e+00> : vector<2x128xf32>
    %22 = vector.multi_reduction <add>, %21, %cst_15 [1] : vector<2x8x128xf32> to vector<2x128xf32>
    %23 = vector.shape_cast %22 : vector<2x128xf32> to vector<2x1x128xf32>
    %cst_16 = arith.constant 0.000000e+00 : f32
    %24 = vector.broadcast %cst_16 : f32 to vector<2x1x128xf32>
    %25 = arith.cmpf ogt, %19, %24 : vector<2x1x128xf32>
    %cst_17 = arith.constant 0.000000e+00 : f32
    %26 = vector.shape_cast %25 : vector<2x1x128xi1> to vector<2x1x128xi1>
    %27 = vector.broadcast %26 : vector<2x1x128xi1> to vector<2x8x128xi1>
    %28 = vector.broadcast %cst_17 : f32 to vector<2x8x128xf32>
    %29 = arith.select %27, %10, %28 : vector<2x8x128xi1>, vector<2x8x128xf32>
    %30 = vector.shape_cast %29 : vector<2x8x128xf32> to vector<16x128xf32>
    %cst_18 = arith.constant 0.000000e+00 : f32
    %31 = vector.broadcast %cst_18 : f32 to vector<2x1x128xf32>
    %32 = arith.cmpf ogt, %23, %31 : vector<2x1x128xf32>
    %cst_19 = arith.constant 0.000000e+00 : f32
    %33 = vector.shape_cast %32 : vector<2x1x128xi1> to vector<2x1x128xi1>
    %34 = vector.broadcast %33 : vector<2x1x128xi1> to vector<2x8x128xi1>
    %35 = vector.broadcast %cst_19 : f32 to vector<2x8x128xf32>
    %36 = arith.select %34, %11, %35 : vector<2x8x128xi1>, vector<2x8x128xf32>
    %37 = vector.shape_cast %36 : vector<2x8x128xf32> to vector<16x128xf32>
    %c0_20 = arith.constant 0 : index
    %c0_21 = arith.constant 0 : index
    %c0_22 = arith.constant 0 : index
    %c0_23 = arith.constant 0 : index
    %38 = vector.load %arg5[%c0_20, %c0_21, %c0_22, %c0_23] : memref<1x2x128x128xf32, #tpu.memory_space<vmem>>, vector<1x1x128x128xf32>
    %39 = vector.shape_cast %38 : vector<1x1x128x128xf32> to vector<128x128xf32>
    %cst_24 = arith.constant dense<0.000000e+00> : vector<16x128xf32>
    %40 = tpu.matmul %30, %39, %cst_24 {dimension_numbers = #tpu.dot_dimension_numbers<[1], [0], [0], [1], [0, 0, 1, 1], [], []>} : vector<16x128xf32>, vector<128x128xf32>, vector<16x128xf32> -> vector<16x128xf32>
    %c0_25 = arith.constant 0 : index
    %c0_26 = arith.constant 0 : index
    %c0_27 = arith.constant 0 : index
    %c0_28 = arith.constant 0 : index
    %41 = vector.load %arg6[%c0_25, %c0_26, %c0_27, %c0_28] : memref<1x2x128x128xf32, #tpu.memory_space<vmem>>, vector<1x1x128x128xf32>
    %42 = vector.shape_cast %41 : vector<1x1x128x128xf32> to vector<128x128xf32>
    %cst_29 = arith.constant dense<0.000000e+00> : vector<16x128xf32>
    %43 = tpu.matmul %37, %42, %cst_29 {dimension_numbers = #tpu.dot_dimension_numbers<[1], [0], [0], [1], [0, 0, 1, 1], [], []>} : vector<16x128xf32>, vector<128x128xf32>, vector<16x128xf32> -> vector<16x128xf32>
    %44 = vector.shape_cast %40 : vector<16x128xf32> to vector<2x8x128xf32>
    %45 = vector.shape_cast %43 : vector<16x128xf32> to vector<2x8x128xf32>
    %cst_30 = arith.constant dense<0.000000e+00> : vector<2x8xf32>
    %46 = vector.multi_reduction <add>, %45, %cst_30 [2] : vector<2x8x128xf32> to vector<2x8xf32>
    %47 = vector.shape_cast %46 : vector<2x8xf32> to vector<2x8x1xf32>
    %cst_31 = arith.constant dense<0.000000e+00> : vector<2x8xf32>
    %48 = vector.multi_reduction <add>, %44, %cst_31 [2] : vector<2x8x128xf32> to vector<2x8xf32>
    %49 = vector.shape_cast %48 : vector<2x8xf32> to vector<2x8x1xf32>
    %50 = vector.broadcast %47 : vector<2x8x1xf32> to vector<2x8x128xf32>
    %51 = arith.mulf %44, %50 : vector<2x8x128xf32>
    %cst_32 = arith.constant dense<0.000000e+00> : vector<2x128xf32>
    %52 = vector.multi_reduction <add>, %51, %cst_32 [1] : vector<2x8x128xf32> to vector<2x128xf32>
    %53 = vector.shape_cast %52 : vector<2x128xf32> to vector<2x1x128xf32>
    %54 = vector.broadcast %49 : vector<2x8x1xf32> to vector<2x8x128xf32>
    %55 = arith.mulf %45, %54 : vector<2x8x128xf32>
    %cst_33 = arith.constant dense<0.000000e+00> : vector<2x128xf32>
    %56 = vector.multi_reduction <add>, %55, %cst_33 [1] : vector<2x8x128xf32> to vector<2x128xf32>
    %57 = vector.shape_cast %56 : vector<2x128xf32> to vector<2x1x128xf32>
    %cst_34 = arith.constant 0.000000e+00 : f32
    %58 = vector.broadcast %cst_34 : f32 to vector<2x1x128xf32>
    %59 = arith.cmpf ogt, %53, %58 : vector<2x1x128xf32>
    %cst_35 = arith.constant 0.000000e+00 : f32
    %60 = vector.shape_cast %59 : vector<2x1x128xi1> to vector<2x1x128xi1>
    %61 = vector.broadcast %60 : vector<2x1x128xi1> to vector<2x8x128xi1>
    %62 = vector.broadcast %cst_35 : f32 to vector<2x8x128xf32>
    %63 = arith.select %61, %44, %62 : vector<2x8x128xi1>, vector<2x8x128xf32>
    %64 = vector.shape_cast %63 : vector<2x8x128xf32> to vector<16x128xf32>
    %cst_36 = arith.constant 0.000000e+00 : f32
    %65 = vector.broadcast %cst_36 : f32 to vector<2x1x128xf32>
    %66 = arith.cmpf ogt, %57, %65 : vector<2x1x128xf32>
    %cst_37 = arith.constant 0.000000e+00 : f32
    %67 = vector.shape_cast %66 : vector<2x1x128xi1> to vector<2x1x128xi1>
    %68 = vector.broadcast %67 : vector<2x1x128xi1> to vector<2x8x128xi1>
    %69 = vector.broadcast %cst_37 : f32 to vector<2x8x128xf32>
    %70 = arith.select %68, %45, %69 : vector<2x8x128xi1>, vector<2x8x128xf32>
    %71 = vector.shape_cast %70 : vector<2x8x128xf32> to vector<16x128xf32>
    %c0_38 = arith.constant 0 : index
    %c1 = arith.constant 1 : index
    %c0_39 = arith.constant 0 : index
    %c0_40 = arith.constant 0 : index
    %72 = vector.load %arg5[%c0_38, %c1, %c0_39, %c0_40] : memref<1x2x128x128xf32, #tpu.memory_space<vmem>>, vector<1x1x128x128xf32>
    %73 = vector.shape_cast %72 : vector<1x1x128x128xf32> to vector<128x128xf32>
    %cst_41 = arith.constant dense<0.000000e+00> : vector<16x128xf32>
    %74 = tpu.matmul %64, %73, %cst_41 {dimension_numbers = #tpu.dot_dimension_numbers<[1], [0], [0], [1], [0, 0, 1, 1], [], []>} : vector<16x128xf32>, vector<128x128xf32>, vector<16x128xf32> -> vector<16x128xf32>
    %c0_42 = arith.constant 0 : index
    %c1_43 = arith.constant 1 : index
    %c0_44 = arith.constant 0 : index
    %c0_45 = arith.constant 0 : index
    %75 = vector.load %arg6[%c0_42, %c1_43, %c0_44, %c0_45] : memref<1x2x128x128xf32, #tpu.memory_space<vmem>>, vector<1x1x128x128xf32>
    %76 = vector.shape_cast %75 : vector<1x1x128x128xf32> to vector<128x128xf32>
    %cst_46 = arith.constant dense<0.000000e+00> : vector<16x128xf32>
    %77 = tpu.matmul %71, %76, %cst_46 {dimension_numbers = #tpu.dot_dimension_numbers<[1], [0], [0], [1], [0, 0, 1, 1], [], []>} : vector<16x128xf32>, vector<128x128xf32>, vector<16x128xf32> -> vector<16x128xf32>
    %c0_47 = arith.constant 0 : index
    %c0_48 = arith.constant 0 : index
    %c0_49 = arith.constant 0 : index
    %78 = vector.load %arg7[%c0_47, %c0_48, %c0_49] : memref<1x16x128xf32, #tpu.memory_space<vmem>>, vector<1x16x128xf32>
    %79 = vector.shape_cast %78 : vector<1x16x128xf32> to vector<16x128xf32>
    %80 = vector.shape_cast %74 : vector<16x128xf32> to vector<1x16x128xf32>
    tpu.vector_store %arg7[%c0_47, %c0_48, %c0_49], %80 {strides = array<i32>} : memref<1x16x128xf32, #tpu.memory_space<vmem>>, vector<1x16x128xf32>,
    %c0_50 = arith.constant 0 : index
    %c0_51 = arith.constant 0 : index
    %c0_52 = arith.constant 0 : index
    %81 = vector.load %arg8[%c0_50, %c0_51, %c0_52] : memref<1x16x128xf32, #tpu.memory_space<vmem>>, vector<1x16x128xf32>
    %82 = vector.shape_cast %81 : vector<1x16x128xf32> to vector<16x128xf32>
    %83 = vector.shape_cast %77 : vector<16x128xf32> to vector<1x16x128xf32>
    tpu.vector_store %arg8[%c0_50, %c0_51, %c0_52], %83 {strides = array<i32>} : memref<1x16x128xf32, #tpu.memory_space<vmem>>, vector<1x16x128xf32>,
    return
  }
  func.func @transform_0(%arg0: i32) -> (i32, i32, i32) {
    %c0_i32 = arith.constant 0 : i32
    %c0_i32_0 = arith.constant 0 : i32
    %c0_i32_1 = arith.constant 0 : i32
    return %arg0, %c0_i32, %c0_i32_0 : i32, i32, i32
  }
  func.func @transform_1(%arg0: i32) -> (i32, i32, i32) {
    %c0_i32 = arith.constant 0 : i32
    %c0_i32_0 = arith.constant 0 : i32
    %c0_i32_1 = arith.constant 0 : i32
    return %arg0, %c0_i32, %c0_i32_0 : i32, i32, i32
  }
  func.func @transform_2(%arg0: i32) -> (i32, i32, i32) {
    %c0_i32 = arith.constant 0 : i32
    %c0_i32_0 = arith.constant 0 : i32
    %c0_i32_1 = arith.constant 0 : i32
    return %arg0, %c0_i32, %c0_i32_0 : i32, i32, i32
  }
  func.func @transform_3(%arg0: i32) -> (i32, i32, i32) {
    %c0_i32 = arith.constant 0 : i32
    %c0_i32_0 = arith.constant 0 : i32
    %c0_i32_1 = arith.constant 0 : i32
    return %arg0, %c0_i32, %c0_i32_0 : i32, i32, i32
  }
  func.func @transform_4(%arg0: i32) -> (i32, i32, i32, i32) {
    %c0_i32 = arith.constant 0 : i32
    %c0_i32_0 = arith.constant 0 : i32
    %c0_i32_1 = arith.constant 0 : i32
    %c0_i32_2 = arith.constant 0 : i32
    return %arg0, %c0_i32, %c0_i32_0, %c0_i32_1 : i32, i32, i32, i32
  }
  func.func @transform_5(%arg0: i32) -> (i32, i32, i32, i32) {
    %c0_i32 = arith.constant 0 : i32
    %c0_i32_0 = arith.constant 0 : i32
    %c0_i32_1 = arith.constant 0 : i32
    %c0_i32_2 = arith.constant 0 : i32
    return %arg0, %c0_i32, %c0_i32_0, %c0_i32_1 : i32, i32, i32, i32
  }
  func.func @transform_6(%arg0: i32) -> (i32, i32, i32) {
    %c0_i32 = arith.constant 0 : i32
    %c0_i32_0 = arith.constant 0 : i32
    %c0_i32_1 = arith.constant 0 : i32
    return %arg0, %c0_i32, %c0_i32_0 : i32, i32, i32
  }
  func.func @transform_7(%arg0: i32) -> (i32, i32, i32) {
    %c0_i32 = arith.constant 0 : i32
    %c0_i32_0 = arith.constant 0 : i32
    %c0_i32_1 = arith.constant 0 : i32
    return %arg0, %c0_i32, %c0_i32_0 : i32, i32, i32
  }
}

</mosaic_0001>

<llo_original>
// kernel: _equivariant_mlp_forward_impl.1
$region0: #{_equivariant_mlp_forward_impl.1}
  #allocation0 [shape = 'u32[]', space=smem, size = 0x4, offset = 0x4, fixed_abs, tag = 'smem constant byte address 0x4 - core index']
  #allocation1 [shape = 'u32[72,128]{1,0:T(1,128)}', space=vmem, size = 0x9000, scoped, tag = 'internal scratch']
  %s0 = inlined_call_operand.vmem [shape: f32[2,16,24], index: 0, kind: input, shape index: {}]
  %s1 = inlined_call_operand.vmem [shape: f32[2,16,24], index: 1, kind: input, shape index: {}]
  %s2 = inlined_call_operand.vmem [shape: f32[2,24,128], index: 2, kind: input, shape index: {}]
  %s3 = inlined_call_operand.vmem [shape: f32[2,24,128], index: 3, kind: input, shape index: {}]
  %s4 = inlined_call_operand.vmem [shape: f32[2,2,128,128], index: 4, kind: input, shape index: {}]
  %s5 = inlined_call_operand.vmem [shape: f32[2,2,128,128], index: 5, kind: input, shape index: {}]
  %s6 = inlined_call_operand.vmem [shape: f32[2,16,128], index: 6, kind: output, shape index: {0}]
  %s7 = inlined_call_operand.vmem [shape: f32[2,16,128], index: 7, kind: output, shape index: {1}]
  %8 = xla_tuple %s6, %s7
  %s9 = sld [smem:[#allocation0]]
  $region65: #{_equivariant_mlp_forward_impl.1} parent=0
    _
  %s11 = ssub.s32 1, %s9
  %s12 = scalar_select 0, %s11, %s9
  loop: start=0, step=1, limit=4
  $region2: #{_equivariant_mlp_forward_impl.1} parent=0 // loop_pre_header
    _
  $region3: #{_equivariant_mlp_forward_impl.1} parent=0 // loop_header
    %s14 = sphi 0, %s18
    %p15 = scmp.ge.s32.totalorder %s14, 4
    %s24 = sphi 0, %s26
    %s27 = sphi 0, %s24
    %s28 = sphi 0, %s27
    %s44 = sphi 0, %s28
    %s50 = sphi 0, %s52
    %s53 = sphi 0, %s50
    %s54 = sphi 0, %s53
    %s70 = sphi 0, %s54
    %s76 = sphi 0, %s78
    %s79 = sphi 0, %s76
    %s80 = sphi 0, %s79
    %s96 = sphi 0, %s80
    %s102 = sphi 0, %s104
    %s105 = sphi 0, %s102
    %s106 = sphi 0, %s105
    %s122 = sphi 0, %s106
    %s128 = sphi 0, %s130
    %s131 = sphi 0, %s128
    %s132 = sphi 0, %s131
    %s148 = sphi 0, %s132
    %s154 = sphi 0, %s156
    %s157 = sphi 0, %s154
    %s158 = sphi 0, %s157
    %s174 = sphi 0, %s158
    %s180 = sphi 0, %s182
    %s183 = sphi 0, %s180
    %s184 = sphi 0, %s183
    %s200 = sphi 0, %s184
    %s206 = sphi 0, %s208
    %s209 = sphi 0, %s206
    %s210 = sphi 0, %s209
    %s226 = sphi 0, %s210
  $region4: #{_equivariant_mlp_forward_impl.1} parent=0 // loop_header_branch
    %17 = sbr.rel (%p15) target = $region8
  $region5: #{_equivariant_mlp_forward_impl.1} parent=0 // loop_body
    %s19 = ssub.s32 %s14, 1
    %s20 = ssub.s32 %s14, 2
    %s21 = sadd.s32 %s14, 1
    %s22 = ssub.s32 %s14, %s21
    %p23 = scmp.eq.s32.totalorder %s22, 0
    %s25 = sadd.s32 %s24, 1
    %s26 = scalar_select %p23, %s24, %s25
    %p29 = pneg %p23
    %p30 = scmp.eq.s32.totalorder %s14, 1
    %p31 = por %p29, %p30
    %p32 = scmp.ne.s32.totalorder %s24, %s27
    %p33 = scmp.eq.s32.totalorder %s14, 0
    %p34 = por %p32, %p33
    %p35 = scmp.ne.s32.totalorder %s24, %s27
    %p36 = scmp.eq.s32.totalorder %s19, 1
    %p37 = por %p35, %p36
    %p38 = scmp.ne.s32.totalorder %s27, %s28
    %p39 = scmp.eq.s32.totalorder %s19, 0
    %p40 = por %p38, %p39
    %p41 = scmp.ne.s32.totalorder %s27, %s28
    %p42 = scmp.eq.s32.totalorder %s20, 1
    %p43 = por %p41, %p42
    %p45 = scmp.ne.s32.totalorder %s28, %s44
    %p46 = scmp.eq.s32.totalorder %s20, 0
    %p47 = por %p45, %p46
    %s48 = ssub.s32 %s14, %s21
    %p49 = scmp.eq.s32.totalorder %s48, 0
    %s51 = sadd.s32 %s50, 1
    %s52 = scalar_select %p49, %s50, %s51
    %p55 = pneg %p49
    %p56 = scmp.eq.s32.totalorder %s14, 1
    %p57 = por %p55, %p56
    %p58 = scmp.ne.s32.totalorder %s50, %s53
    %p59 = scmp.eq.s32.totalorder %s14, 0
    %p60 = por %p58, %p59
    %p61 = scmp.ne.s32.totalorder %s50, %s53
    %p62 = scmp.eq.s32.totalorder %s19, 1
    %p63 = por %p61, %p62
    %p64 = scmp.ne.s32.totalorder %s53, %s54
    %p65 = scmp.eq.s32.totalorder %s19, 0
    %p66 = por %p64, %p65
    %p67 = scmp.ne.s32.totalorder %s53, %s54
    %p68 = scmp.eq.s32.totalorder %s20, 1
    %p69 = por %p67, %p68
    %p71 = scmp.ne.s32.totalorder %s54, %s70
    %p72 = scmp.eq.s32.totalorder %s20, 0
    %p73 = por %p71, %p72
    %s74 = ssub.s32 %s14, %s21
    %p75 = scmp.eq.s32.totalorder %s74, 0
    %s77 = sadd.s32 %s76, 1
    %s78 = scalar_select %p75, %s76, %s77
    %p81 = pneg %p75
    %p82 = scmp.eq.s32.totalorder %s14, 1
    %p83 = por %p81, %p82
    %p84 = scmp.ne.s32.totalorder %s76, %s79
    %p85 = scmp.eq.s32.totalorder %s14, 0
    %p86 = por %p84, %p85
    %p87 = scmp.ne.s32.totalorder %s76, %s79
    %p88 = scmp.eq.s32.totalorder %s19, 1
    %p89 = por %p87, %p88
    %p90 = scmp.ne.s32.totalorder %s79, %s80
    %p91 = scmp.eq.s32.totalorder %s19, 0
    %p92 = por %p90, %p91
    %p93 = scmp.ne.s32.totalorder %s79, %s80
    %p94 = scmp.eq.s32.totalorder %s20, 1
    %p95 = por %p93, %p94
    %p97 = scmp.ne.s32.totalorder %s80, %s96
    %p98 = scmp.eq.s32.totalorder %s20, 0
    %p99 = por %p97, %p98
    %s100 = ssub.s32 %s14, %s21
    %p101 = scmp.eq.s32.totalorder %s100, 0
    %s103 = sadd.s32 %s102, 1
    %s104 = scalar_select %p101, %s102, %s103
    %p107 = pneg %p101
    %p108 = scmp.eq.s32.totalorder %s14, 1
    %p109 = por %p107, %p108
    %p110 = scmp.ne.s32.totalorder %s102, %s105
    %p111 = scmp.eq.s32.totalorder %s14, 0
    %p112 = por %p110, %p111
    %p113 = scmp.ne.s32.totalorder %s102, %s105
    %p114 = scmp.eq.s32.totalorder %s19, 1
    %p115 = por %p113, %p114
    %p116 = scmp.ne.s32.totalorder %s105, %s106
    %p117 = scmp.eq.s32.totalorder %s19, 0
    %p118 = por %p116, %p117
    %p119 = scmp.ne.s32.totalorder %s105, %s106
    %p120 = scmp.eq.s32.totalorder %s20, 1
    %p121 = por %p119, %p120
    %p123 = scmp.ne.s32.totalorder %s106, %s122
    %p124 = scmp.eq.s32.totalorder %s20, 0
    %p125 = por %p123, %p124
    %s126 = ssub.s32 %s14, %s21
    %p127 = scmp.eq.s32.totalorder %s126, 0
    %s129 = sadd.s32 %s128, 1
    %s130 = scalar_select %p127, %s128, %s129
    %p133 = pneg %p127
    %p134 = scmp.eq.s32.totalorder %s14, 1
    %p135 = por %p133, %p134
    %p136 = scmp.ne.s32.totalorder %s128, %s131
    %p137 = scmp.eq.s32.totalorder %s14, 0
    %p138 = por %p136, %p137
    %p139 = scmp.ne.s32.totalorder %s128, %s131
    %p140 = scmp.eq.s32.totalorder %s19, 1
    %p141 = por %p139, %p140
    %p142 = scmp.ne.s32.totalorder %s131, %s132
    %p143 = scmp.eq.s32.totalorder %s19, 0
    %p144 = por %p142, %p143
    %p145 = scmp.ne.s32.totalorder %s131, %s132
    %p146 = scmp.eq.s32.totalorder %s20, 1
    %p147 = por %p145, %p146
    %p149 = scmp.ne.s32.totalorder %s132, %s148
    %p150 = scmp.eq.s32.totalorder %s20, 0
    %p151 = por %p149, %p150
    %s152 = ssub.s32 %s14, %s21
    %p153 = scmp.eq.s32.totalorder %s152, 0
    %s155 = sadd.s32 %s154, 1
    %s156 = scalar_select %p153, %s154, %s155
    %p159 = pneg %p153
    %p160 = scmp.eq.s32.totalorder %s14, 1
    %p161 = por %p159, %p160
    %p162 = scmp.ne.s32.totalorder %s154, %s157
    %p163 = scmp.eq.s32.totalorder %s14, 0
    %p164 = por %p162, %p163
    %p165 = scmp.ne.s32.totalorder %s154, %s157
    %p166 = scmp.eq.s32.totalorder %s19, 1
    %p167 = por %p165, %p166
    %p168 = scmp.ne.s32.totalorder %s157, %s158
    %p169 = scmp.eq.s32.totalorder %s19, 0
    %p170 = por %p168, %p169
    %p171 = scmp.ne.s32.totalorder %s157, %s158
    %p172 = scmp.eq.s32.totalorder %s20, 1
    %p173 = por %p171, %p172
    %p175 = scmp.ne.s32.totalorder %s158, %s174
    %p176 = scmp.eq.s32.totalorder %s20, 0
    %p177 = por %p175, %p176
    %s178 = ssub.s32 %s14, %s21
    %p179 = scmp.eq.s32.totalorder %s178, 0
    %s181 = sadd.s32 %s180, 1
    %s182 = scalar_select %p179, %s180, %s181
    %p185 = pneg %p179
    %p186 = scmp.eq.s32.totalorder %s14, 1
    %p187 = por %p185, %p186
    %p188 = scmp.ne.s32.totalorder %s180, %s183
    %p189 = scmp.eq.s32.totalorder %s14, 0
    %p190 = por %p188, %p189
    %p191 = scmp.ne.s32.totalorder %s180, %s183
    %p192 = scmp.eq.s32.totalorder %s19, 1
    %p193 = por %p191, %p192
    %p194 = scmp.ne.s32.totalorder %s183, %s184
    %p195 = scmp.eq.s32.totalorder %s19, 0
    %p196 = por %p194, %p195
    %p197 = scmp.ne.s32.totalorder %s183, %s184
    %p198 = scmp.eq.s32.totalorder %s20, 1
    %p199 = por %p197, %p198
    %p201 = scmp.ne.s32.totalorder %s184, %s200
    %p202 = scmp.eq.s32.totalorder %s20, 0
    %p203 = por %p201, %p202
    %s204 = ssub.s32 %s14, %s21
    %p205 = scmp.eq.s32.totalorder %s204, 0
    %s207 = sadd.s32 %s206, 1
    %s208 = scalar_select %p205, %s206, %s207
    %p211 = pneg %p205
    %p212 = scmp.eq.s32.totalorder %s14, 1
    %p213 = por %p211, %p212
    %p214 = scmp.ne.s32.totalorder %s206, %s209
    %p215 = scmp.eq.s32.totalorder %s14, 0
    %p216 = por %p214, %p215
    %p217 = scmp.ne.s32.totalorder %s206, %s209
    %p218 = scmp.eq.s32.totalorder %s19, 1
    %p219 = por %p217, %p218
    %p220 = scmp.ne.s32.totalorder %s209, %s210
    %p221 = scmp.eq.s32.totalorder %s19, 0
    %p222 = por %p220, %p221
    %p223 = scmp.ne.s32.totalorder %s209, %s210
    %p224 = scmp.eq.s32.totalorder %s20, 1
    %p225 = por %p223, %p224
    %p227 = scmp.ne.s32.totalorder %s210, %s226
    %p228 = scmp.eq.s32.totalorder %s20, 0
    %p229 = por %p227, %p228
    %p230 = scmp.le.s32.totalorder 1, %s14
    %p231 = scmp.lt.s32.totalorder %s14, 3
    %p232 = pnand %p230, %p231
    %p233 = pneg %p232
    // Predicated region
    $region9: #{_equivariant_mlp_forward_impl.1} parent=5 // pred_check
      _
    $region10: #{_equivariant_mlp_forward_impl.1} parent=5 // pred_check_branch
      %235 = sbr.rel (%p232) target = $region12
    $region11: #{_equivariant_mlp_forward_impl.1} parent=5 // pred_region
      %s236 = ssub.s32 %s14, 1
    $region12: #{_equivariant_mlp_forward_impl.1} parent=5 // pred_fallthru
      _
    %p237 = scmp.lt.s32.totalorder %s14, 2
    // Predicated region
    $region13: #{_equivariant_mlp_forward_impl.1} parent=5 // pred_check
      %p238 = pneg %p237
    $region14: #{_equivariant_mlp_forward_impl.1} parent=5 // pred_check_branch
      %240 = sbr.rel (%p238) target = $region16
    $region15: #{_equivariant_mlp_forward_impl.1} parent=5 // pred_region
      // Predicated region
      $region17: #{_equivariant_mlp_forward_impl.1} parent=15 // pred_check
        %p241 = pneg %p34
      $region18: #{_equivariant_mlp_forward_impl.1} parent=15 // pred_check_branch
        %243 = sbr.rel (%p241) target = $region20
      $region19: #{_equivariant_mlp_forward_impl.1} parent=15 // pred_region
        %p244 = scmp.lt.s32.totalorder %s14, 1
        %s245 = scalar_select %p244, %s14, 1
        %s246 = smul.addr %s245, 2
        %s247 = smul.addr %s246, 8
        %s248 = scalar_lea.vmem %s0, %s247
      $region20: #{_equivariant_mlp_forward_impl.1} parent=15 // pred_fallthru
        _
      // Predicated region
      $region21: #{_equivariant_mlp_forward_impl.1} parent=15 // pred_check
        %p249 = pneg %p60
      $region22: #{_equivariant_mlp_forward_impl.1} parent=15 // pred_check_branch
        %251 = sbr.rel (%p249) target = $region24
      $region23: #{_equivariant_mlp_forward_impl.1} parent=15 // pred_region
        %p252 = scmp.lt.s32.totalorder %s14, 1
        %s253 = scalar_select %p252, %s14, 1
        %s254 = smul.addr %s253, 2
        %s255 = smul.addr %s254, 8
        %s256 = scalar_lea.vmem %s1, %s255
      $region24: #{_equivariant_mlp_forward_impl.1} parent=15 // pred_fallthru
        _
      // Predicated region
      $region25: #{_equivariant_mlp_forward_impl.1} parent=15 // pred_check
        %p257 = pneg %p86
      $region26: #{_equivariant_mlp_forward_impl.1} parent=15 // pred_check_branch
        %259 = sbr.rel (%p257) target = $region28
      $region27: #{_equivariant_mlp_forward_impl.1} parent=15 // pred_region
        %p260 = scmp.lt.s32.totalorder %s14, 1
        %s261 = scalar_select %p260, %s14, 1
        %s262 = smul.addr %s261, 3
        %s263 = smul.addr %s262, 8
        %s264 = scalar_lea.vmem %s2, %s263
      $region28: #{_equivariant_mlp_forward_impl.1} parent=15 // pred_fallthru
        _
      // Predicated region
      $region29: #{_equivariant_mlp_forward_impl.1} parent=15 // pred_check
        %p265 = pneg %p112
      $region30: #{_equivariant_mlp_forward_impl.1} parent=15 // pred_check_branch
        %267 = sbr.rel (%p265) target = $region32
      $region31: #{_equivariant_mlp_forward_impl.1} parent=15 // pred_region
        %p268 = scmp.lt.s32.totalorder %s14, 1
        %s269 = scalar_select %p268, %s14, 1
        %s270 = smul.addr %s269, 3
        %s271 = smul.addr %s270, 8
        %s272 = scalar_lea.vmem %s3, %s271
      $region32: #{_equivariant_mlp_forward_impl.1} parent=15 // pred_fallthru
        _
      // Predicated region
      $region33: #{_equivariant_mlp_forward_impl.1} parent=15 // pred_check
        %p273 = pneg %p138
      $region34: #{_equivariant_mlp_forward_impl.1} parent=15 // pred_check_branch
        %275 = sbr.rel (%p273) target = $region36
      $region35: #{_equivariant_mlp_forward_impl.1} parent=15 // pred_region
        %p276 = scmp.lt.s32.totalorder %s14, 1
        %s277 = scalar_select %p276, %s14, 1
        %s278 = smul.addr %s277, 32
        %s279 = smul.addr %s278, 8
        %s280 = scalar_lea.vmem %s4, %s279
      $region36: #{_equivariant_mlp_forward_impl.1} parent=15 // pred_fallthru
        _
      // Predicated region
      $region37: #{_equivariant_mlp_forward_impl.1} parent=15 // pred_check
        %p281 = pneg %p164
      $region38: #{_equivariant_mlp_forward_impl.1} parent=15 // pred_check_branch
        %283 = sbr.rel (%p281) target = $region40
      $region39: #{_equivariant_mlp_forward_impl.1} parent=15 // pred_region
        %p284 = scmp.lt.s32.totalorder %s14, 1
        %s285 = scalar_select %p284, %s14, 1
        %s286 = smul.addr %s285, 32
        %s287 = smul.addr %s286, 8
        %s288 = scalar_lea.vmem %s5, %s287
      $region40: #{_equivariant_mlp_forward_impl.1} parent=15 // pred_fallthru
        _
    $region16: #{_equivariant_mlp_forward_impl.1} parent=5 // pred_fallthru
      _
    %p289 = scmp.le.s32.totalorder 1, %s14
    %p290 = scmp.lt.s32.totalorder %s14, 3
    %p291 = pnand %p289, %p290
    %p292 = pneg %p291
    // Predicated region
    $region41: #{_equivariant_mlp_forward_impl.1} parent=5 // pred_check
      _
    $region42: #{_equivariant_mlp_forward_impl.1} parent=5 // pred_check_branch
      %294 = sbr.rel (%p291) target = $region44
    $region43: #{_equivariant_mlp_forward_impl.1} parent=5 // pred_region
      %s295 = ssub.s32 %s14, 1
      %p296 = scmp.lt.s32.totalorder %s19, 1
      %s297 = scalar_select %p296, %s19, 1
      %s298 = smul.addr %s297, 2
      %s299 = smul.addr %s298, 8
      %s300 = scalar_lea.vmem %s0, %s299
      %p301 = pneg %p40
      %p302 = pneg %p37
      %p303 = scmp.lt.s32.totalorder %s19, 1
      %s304 = scalar_select %p303, %s19, 1
      %s305 = smul.addr %s304, 2
      %s306 = smul.addr %s305, 8
      %s307 = scalar_lea.vmem %s1, %s306
      %p308 = pneg %p66
      %p309 = pneg %p63
      %p310 = scmp.lt.s32.totalorder %s19, 1
      %s311 = scalar_select %p310, %s19, 1
      %s312 = smul.addr %s311, 3
      %s313 = smul.addr %s312, 8
      %s314 = scalar_lea.vmem %s2, %s313
      %p315 = pneg %p92
      %p316 = pneg %p89
      %p317 = scmp.lt.s32.totalorder %s19, 1
      %s318 = scalar_select %p317, %s19, 1
      %s319 = smul.addr %s318, 3
      %s320 = smul.addr %s319, 8
      %s321 = scalar_lea.vmem %s3, %s320
      %p322 = pneg %p118
      %p323 = pneg %p115
      %p324 = scmp.lt.s32.totalorder %s19, 1
      %s325 = scalar_select %p324, %s19, 1
      %s326 = smul.addr %s325, 32
      %s327 = smul.addr %s326, 8
      %s328 = scalar_lea.vmem %s4, %s327
      %p329 = pneg %p144
      %p330 = pneg %p141
      %p331 = scmp.lt.s32.totalorder %s19, 1
      %s332 = scalar_select %p331, %s19, 1
      %s333 = smul.addr %s332, 32
      %s334 = smul.addr %s333, 8
      %s335 = scalar_lea.vmem %s5, %s334
      %p336 = pneg %p170
      %p337 = pneg %p167
      %p338 = pneg %p196
      %p339 = pneg %p193
      %p340 = scmp.lt.s32.totalorder %s19, 1
      %s341 = scalar_select %p340, %s19, 1
      %s342 = smul.addr %s341, 2
      %s343 = smul.addr %s342, 8
      %s344 = scalar_lea.vmem %s6, %s343
      %p345 = pneg %p222
      %p346 = pneg %p219
      %p347 = scmp.lt.s32.totalorder %s19, 1
      %s348 = scalar_select %p347, %s19, 1
      %s349 = smul.addr %s348, 2
      %s350 = smul.addr %s349, 8
      %s351 = scalar_lea.vmem %s7, %s350
      %p352 = scmp.lt.s32.totalorder %s19, 1
      %s353 = scalar_select %p352, %s19, 1
      %s354 = smul.addr %s353, 2
      %s355 = smul.addr %s354, 8
      %s356 = scalar_lea.vmem %s0, %s355
      %p357 = scmp.lt.s32.totalorder %s19, 1
      %s358 = scalar_select %p357, %s19, 1
      %s359 = smul.addr %s358, 2
      %s360 = smul.addr %s359, 8
      %s361 = scalar_lea.vmem %s1, %s360
      %p362 = scmp.lt.s32.totalorder %s19, 1
      %s363 = scalar_select %p362, %s19, 1
      %s364 = smul.addr %s363, 3
      %s365 = smul.addr %s364, 8
      %s366 = scalar_lea.vmem %s2, %s365
      %p367 = scmp.lt.s32.totalorder %s19, 1
      %s368 = scalar_select %p367, %s19, 1
      %s369 = smul.addr %s368, 3
      %s370 = smul.addr %s369, 8
      %s371 = scalar_lea.vmem %s3, %s370
      %p372 = scmp.lt.s32.totalorder %s19, 1
      %s373 = scalar_select %p372, %s19, 1
      %s374 = smul.addr %s373, 32
      %s375 = smul.addr %s374, 8
      %s376 = scalar_lea.vmem %s4, %s375
      %p377 = scmp.lt.s32.totalorder %s19, 1
      %s378 = scalar_select %p377, %s19, 1
      %s379 = smul.addr %s378, 32
      %s380 = smul.addr %s379, 8
      %s381 = scalar_lea.vmem %s5, %s380
      %p382 = scmp.lt.s32.totalorder %s19, 1
      %s383 = scalar_select %p382, %s19, 1
      %s384 = smul.addr %s383, 2
      %s385 = smul.addr %s384, 8
      %s386 = scalar_lea.vmem %s6, %s385
      %p387 = scmp.lt.s32.totalorder %s19, 1
      %s388 = scalar_select %p387, %s19, 1
      %s389 = smul.addr %s388, 2
      %s390 = smul.addr %s389, 8
      %s391 = scalar_lea.vmem %s7, %s390
      %v392 = vld [vmem:[%s356] sm:$0xff]
      %v393 = vld [vmem:[%s356 + $0x8] sm:$0xff]
      %v394 = vld [vmem:[%s366] sm:$0xff]
      %v395 = vld [vmem:[%s366 + $0x8] sm:$0xff]
      %v396 = vld [vmem:[%s366 + $0x10] sm:$0xff]
      %vm397 = vcmask 195584
      %v399 = vsel %vm397, %v392, 0
      %v402 = vsel %vm397, %v393, 0
      %404 = vmatpush.msra.mxu0 0.0
      %405 = vmatpush.msra.mxu0 0.0
      %406 = vmatpush.msra.mxu0 0.0
      %407 = vmatpush.msra.mxu0 0.0
      %408 = vmatpush.msra.mxu0 0.0
      %409 = vmatpush.msra.mxu0 0.0
      %410 = vmatpush.msra.mxu0 0.0
      %411 = vmatpush.msra.mxu0 0.0
      %412 = vmatpush.msra.mxu0 0.0
      %413 = vmatpush.msra.mxu0 0.0
      %414 = vmatpush.msra.mxu0 0.0
      %415 = vmatpush.msra.mxu0 0.0
      %416 = vmatpush.msra.mxu0 0.0
      %417 = vmatpush.msra.mxu0 %v396
      %418 = vmatpush.msra.mxu0 %v395
      %419 = vmatpush.msra.mxu0 %v394
      %420 = vmatmul.f32.gmra.mxu0 %v399
      %v421 = vpop.f32.mrf.mxu0
      %v422 = vadd.f32 0.0, %v421
      %423 = vmatmul.f32.gmra.mxu0 %v402
      %v424 = vpop.f32.mrf.mxu0
      %v425 = vadd.f32 0.0, %v424
      %426 = vdwg.mxu0
      %v427 = vld [vmem:[%s361] sm:$0xff]
      %v428 = vld [vmem:[%s361 + $0x8] sm:$0xff]
      %v429 = vld [vmem:[%s371] sm:$0xff]
      %v430 = vld [vmem:[%s371 + $0x8] sm:$0xff]
      %v431 = vld [vmem:[%s371 + $0x10] sm:$0xff]
      %v433 = vsel %vm397, %v427, 0
      %v436 = vsel %vm397, %v428, 0
      %438 = vmatpush.msra.mxu0 0.0
      %439 = vmatpush.msra.mxu0 0.0
      %440 = vmatpush.msra.mxu0 0.0
      %441 = vmatpush.msra.mxu0 0.0
      %442 = vmatpush.msra.mxu0 0.0
      %443 = vmatpush.msra.mxu0 0.0
      %444 = vmatpush.msra.mxu0 0.0
      %445 = vmatpush.msra.mxu0 0.0
      %446 = vmatpush.msra.mxu0 0.0
      %447 = vmatpush.msra.mxu0 0.0
      %448 = vmatpush.msra.mxu0 0.0
      %449 = vmatpush.msra.mxu0 0.0
      %450 = vmatpush.msra.mxu0 0.0
      %451 = vmatpush.msra.mxu0 %v431
      %452 = vmatpush.msra.mxu0 %v430
      %453 = vmatpush.msra.mxu0 %v429
      %454 = vmatmul.f32.gmra.mxu0 %v433
      %v455 = vpop.f32.mrf.mxu0
      %v456 = vadd.f32 0.0, %v455
      %457 = vmatmul.f32.gmra.mxu0 %v436
      %v458 = vpop.f32.mrf.mxu0
      %v459 = vadd.f32 0.0, %v458
      %460 = vdwg.mxu0
      %461 = vadd.xlane.f32.xlu0 %v456
      %v462 = vpop.xlane.xlu0 %461
      %463 = vadd.xlane.f32.xlu0 %v459
      %v464 = vpop.xlane.xlu0 %463
      %465 = vadd.xlane.f32.xlu0 %v422
      %v466 = vpop.xlane.xlu0 %465
      %467 = vadd.xlane.f32.xlu0 %v425
      %v468 = vpop.xlane.xlu0 %467
      %v469 = vmul.f32 %v422, %v462
      %v470 = vmul.f32 %v425, %v464
      %v471 = vrot.slane %v469, 4
      %v472 = vadd.f32 %v469, %v471
      %v473 = vrot.slane %v472, 2
      %v474 = vadd.f32 %v472, %v473
      %v475 = vrot.slane %v474, 1
      %v476 = vadd.f32 %v474, %v475
      %v477 = vrot.slane %v470, 4
      %v478 = vadd.f32 %v470, %v477
      %v479 = vrot.slane %v478, 2
      %v480 = vadd.f32 %v478, %v479
      %v481 = vrot.slane %v480, 1
      %v482 = vadd.f32 %v480, %v481
      %v483 = vmul.f32 %v456, %v466
      %v484 = vmul.f32 %v459, %v468
      %v485 = vrot.slane %v483, 4
      %v486 = vadd.f32 %v483, %v485
      %v487 = vrot.slane %v486, 2
      %v488 = vadd.f32 %v486, %v487
      %v489 = vrot.slane %v488, 1
      %v490 = vadd.f32 %v488, %v489
      %v491 = vrot.slane %v484, 4
      %v492 = vadd.f32 %v484, %v491
      %v493 = vrot.slane %v492, 2
      %v494 = vadd.f32 %v492, %v493
      %v495 = vrot.slane %v494, 1
      %v496 = vadd.f32 %v494, %v495
      %vm497 = vcmp.gt.f32.partialorder %v476, 0.0
      %vm498 = vcmp.gt.f32.partialorder %v482, 0.0
      %v499 = vsel %vm497, 1, 0
      %v500 = vsel %vm498, 1, 0
      %vm501 = vcmp.eq.s32.totalorder %v499, 1
      %vm502 = vcmp.eq.s32.totalorder %v500, 1
      %v503 = vsel %vm501, %v422, 0.0
      %v504 = vsel %vm502, %v425, 0.0
      %vm505 = vcmp.gt.f32.partialorder %v490, 0.0
      %vm506 = vcmp.gt.f32.partialorder %v496, 0.0
      %v507 = vsel %vm505, 1, 0
      %v508 = vsel %vm506, 1, 0
      %vm509 = vcmp.eq.s32.totalorder %v507, 1
      %vm510 = vcmp.eq.s32.totalorder %v508, 1
      %v511 = vsel %vm509, %v456, 0.0
      %v512 = vsel %vm510, %v459, 0.0
      %v513 = vld [vmem:[%s376] sm:$0xff]
      %v514 = vld [vmem:[%s376 + $0x8] sm:$0xff]
      %v515 = vld [vmem:[%s376 + $0x10] sm:$0xff]
      %v516 = vld [vmem:[%s376 + $0x18] sm:$0xff]
      %v517 = vld [vmem:[%s376 + $0x20] sm:$0xff]
      %v518 = vld [vmem:[%s376 + $0x28] sm:$0xff]
      %v519 = vld [vmem:[%s376 + $0x30] sm:$0xff]
      %v520 = vld [vmem:[%s376 + $0x38] sm:$0xff]
      %v521 = vld [vmem:[%s376 + $0x40] sm:$0xff]
      %v522 = vld [vmem:[%s376 + $0x48] sm:$0xff]
      %v523 = vld [vmem:[%s376 + $0x50] sm:$0xff]
      %v524 = vld [vmem:[%s376 + $0x58] sm:$0xff]
      %v525 = vld [vmem:[%s376 + $0x60] sm:$0xff]
      %v526 = vld [vmem:[%s376 + $0x68] sm:$0xff]
      %v527 = vld [vmem:[%s376 + $0x70] sm:$0xff]
      %v528 = vld [vmem:[%s376 + $0x78] sm:$0xff]
      %529 = vmatpush.msra.mxu0 %v528
      %530 = vmatpush.msra.mxu0 %v527
      %531 = vmatpush.msra.mxu0 %v526
      %532 = vmatpush.msra.mxu0 %v525
      %533 = vmatpush.msra.mxu0 %v524
      %534 = vmatpush.msra.mxu0 %v523
      %535 = vmatpush.msra.mxu0 %v522
      %536 = vmatpush.msra.mxu0 %v521
      %537 = vmatpush.msra.mxu0 %v520
      %538 = vmatpush.msra.mxu0 %v519
      %539 = vmatpush.msra.mxu0 %v518
      %540 = vmatpush.msra.mxu0 %v517
      %541 = vmatpush.msra.mxu0 %v516
      %542 = vmatpush.msra.mxu0 %v515
      %543 = vmatpush.msra.mxu0 %v514
      %544 = vmatpush.msra.mxu0 %v513
      %545 = vmatmul.f32.gmra.mxu0 %v503
      %v546 = vpop.f32.mrf.mxu0
      %v547 = vadd.f32 0.0, %v546
      %548 = vmatmul.f32.gmra.mxu0 %v504
      %v549 = vpop.f32.mrf.mxu0
      %v550 = vadd.f32 0.0, %v549
      %551 = vdwg.mxu0
      %v552 = vld [vmem:[%s381] sm:$0xff]
      %v553 = vld [vmem:[%s381 + $0x8] sm:$0xff]
      %v554 = vld [vmem:[%s381 + $0x10] sm:$0xff]
      %v555 = vld [vmem:[%s381 + $0x18] sm:$0xff]
      %v556 = vld [vmem:[%s381 + $0x20] sm:$0xff]
      %v557 = vld [vmem:[%s381 + $0x28] sm:$0xff]
      %v558 = vld [vmem:[%s381 + $0x30] sm:$0xff]
      %v559 = vld [vmem:[%s381 + $0x38] sm:$0xff]
      %v560 = vld [vmem:[%s381 + $0x40] sm:$0xff]
      %v561 = vld [vmem:[%s381 + $0x48] sm:$0xff]
      %v562 = vld [vmem:[%s381 + $0x50] sm:$0xff]
      %v563 = vld [vmem:[%s381 + $0x58] sm:$0xff]
      %v564 = vld [vmem:[%s381 + $0x60] sm:$0xff]
      %v565 = vld [vmem:[%s381 + $0x68] sm:$0xff]
      %v566 = vld [vmem:[%s381 + $0x70] sm:$0xff]
      %v567 = vld [vmem:[%s381 + $0x78] sm:$0xff]
      %568 = vmatpush.msra.mxu0 %v567
      %569 = vmatpush.msra.mxu0 %v566
      %570 = vmatpush.msra.mxu0 %v565
      %571 = vmatpush.msra.mxu0 %v564
      %572 = vmatpush.msra.mxu0 %v563
      %573 = vmatpush.msra.mxu0 %v562
      %574 = vmatpush.msra.mxu0 %v561
      %575 = vmatpush.msra.mxu0 %v560
      %576 = vmatpush.msra.mxu0 %v559
      %577 = vmatpush.msra.mxu0 %v558
      %578 = vmatpush.msra.mxu0 %v557
      %579 = vmatpush.msra.mxu0 %v556
      %580 = vmatpush.msra.mxu0 %v555
      %581 = vmatpush.msra.mxu0 %v554
      %582 = vmatpush.msra.mxu0 %v553
      %583 = vmatpush.msra.mxu0 %v552
      %584 = vmatmul.f32.gmra.mxu0 %v511
      %v585 = vpop.f32.mrf.mxu0
      %v586 = vadd.f32 0.0, %v585
      %587 = vmatmul.f32.gmra.mxu0 %v512
      %v588 = vpop.f32.mrf.mxu0
      %v589 = vadd.f32 0.0, %v588
      %590 = vdwg.mxu0
      %591 = vadd.xlane.f32.xlu0 %v586
      %v592 = vpop.xlane.xlu0 %591
      %593 = vadd.xlane.f32.xlu0 %v589
      %v594 = vpop.xlane.xlu0 %593
      %595 = vadd.xlane.f32.xlu0 %v547
      %v596 = vpop.xlane.xlu0 %595
      %597 = vadd.xlane.f32.xlu0 %v550
      %v598 = vpop.xlane.xlu0 %597
      %v599 = vmul.f32 %v547, %v592
      %v600 = vmul.f32 %v550, %v594
      %v601 = vrot.slane %v599, 4
      %v602 = vadd.f32 %v599, %v601
      %v603 = vrot.slane %v602, 2
      %v604 = vadd.f32 %v602, %v603
      %v605 = vrot.slane %v604, 1
      %v606 = vadd.f32 %v604, %v605
      %v607 = vrot.slane %v600, 4
      %v608 = vadd.f32 %v600, %v607
      %v609 = vrot.slane %v608, 2
      %v610 = vadd.f32 %v608, %v609
      %v611 = vrot.slane %v610, 1
      %v612 = vadd.f32 %v610, %v611
      %v613 = vmul.f32 %v586, %v596
      %v614 = vmul.f32 %v589, %v598
      %v615 = vrot.slane %v613, 4
      %v616 = vadd.f32 %v613, %v615
      %v617 = vrot.slane %v616, 2
      %v618 = vadd.f32 %v616, %v617
      %v619 = vrot.slane %v618, 1
      %v620 = vadd.f32 %v618, %v619
      %v621 = vrot.slane %v614, 4
      %v622 = vadd.f32 %v614, %v621
      %v623 = vrot.slane %v622, 2
      %v624 = vadd.f32 %v622, %v623
      %v625 = vrot.slane %v624, 1
      %v626 = vadd.f32 %v624, %v625
      %vm627 = vcmp.gt.f32.partialorder %v606, 0.0
      %vm628 = vcmp.gt.f32.partialorder %v612, 0.0
      %v629 = vsel %vm627, 1, 0
      %v630 = vsel %vm628, 1, 0
      %vm631 = vcmp.eq.s32.totalorder %v629, 1
      %vm632 = vcmp.eq.s32.totalorder %v630, 1
      %v633 = vsel %vm631, %v547, 0.0
      %v634 = vsel %vm632, %v550, 0.0
      %vm635 = vcmp.gt.f32.partialorder %v620, 0.0
      %vm636 = vcmp.gt.f32.partialorder %v626, 0.0
      %v637 = vsel %vm635, 1, 0
      %v638 = vsel %vm636, 1, 0
      %vm639 = vcmp.eq.s32.totalorder %v637, 1
      %vm640 = vcmp.eq.s32.totalorder %v638, 1
      %v641 = vsel %vm639, %v586, 0.0
      %v642 = vsel %vm640, %v589, 0.0
      %s643 = scalar_lea.vmem %s376, 128
      %v644 = vld [vmem:[%s643] sm:$0xff]
      %v645 = vld [vmem:[%s643 + $0x8] sm:$0xff]
      %v646 = vld [vmem:[%s643 + $0x10] sm:$0xff]
      %v647 = vld [vmem:[%s643 + $0x18] sm:$0xff]
      %v648 = vld [vmem:[%s643 + $0x20] sm:$0xff]
      %v649 = vld [vmem:[%s643 + $0x28] sm:$0xff]
      %v650 = vld [vmem:[%s643 + $0x30] sm:$0xff]
      %v651 = vld [vmem:[%s643 + $0x38] sm:$0xff]
      %v652 = vld [vmem:[%s643 + $0x40] sm:$0xff]
      %v653 = vld [vmem:[%s643 + $0x48] sm:$0xff]
      %v654 = vld [vmem:[%s643 + $0x50] sm:$0xff]
      %v655 = vld [vmem:[%s643 + $0x58] sm:$0xff]
      %v656 = vld [vmem:[%s643 + $0x60] sm:$0xff]
      %v657 = vld [vmem:[%s643 + $0x68] sm:$0xff]
      %v658 = vld [vmem:[%s643 + $0x70] sm:$0xff]
      %v659 = vld [vmem:[%s643 + $0x78] sm:$0xff]
      %660 = vmatpush.msra.mxu0 %v659
      %661 = vmatpush.msra.mxu0 %v658
      %662 = vmatpush.msra.mxu0 %v657
      %663 = vmatpush.msra.mxu0 %v656
      %664 = vmatpush.msra.mxu0 %v655
      %665 = vmatpush.msra.mxu0 %v654
      %666 = vmatpush.msra.mxu0 %v653
      %667 = vmatpush.msra.mxu0 %v652
      %668 = vmatpush.msra.mxu0 %v651
      %669 = vmatpush.msra.mxu0 %v650
      %670 = vmatpush.msra.mxu0 %v649
      %671 = vmatpush.msra.mxu0 %v648
      %672 = vmatpush.msra.mxu0 %v647
      %673 = vmatpush.msra.mxu0 %v646
      %674 = vmatpush.msra.mxu0 %v645
      %675 = vmatpush.msra.mxu0 %v644
      %676 = vmatmul.f32.gmra.mxu0 %v633
      %v677 = vpop.f32.mrf.mxu0
      %v678 = vadd.f32 0.0, %v677
      %679 = vmatmul.f32.gmra.mxu0 %v634
      %v680 = vpop.f32.mrf.mxu0
      %v681 = vadd.f32 0.0, %v680
      %682 = vdwg.mxu0
      %s683 = scalar_lea.vmem %s381, 128
      %v684 = vld [vmem:[%s683] sm:$0xff]
      %v685 = vld [vmem:[%s683 + $0x8] sm:$0xff]
      %v686 = vld [vmem:[%s683 + $0x10] sm:$0xff]
      %v687 = vld [vmem:[%s683 + $0x18] sm:$0xff]
      %v688 = vld [vmem:[%s683 + $0x20] sm:$0xff]
      %v689 = vld [vmem:[%s683 + $0x28] sm:$0xff]
      %v690 = vld [vmem:[%s683 + $0x30] sm:$0xff]
      %v691 = vld [vmem:[%s683 + $0x38] sm:$0xff]
      %v692 = vld [vmem:[%s683 + $0x40] sm:$0xff]
      %v693 = vld [vmem:[%s683 + $0x48] sm:$0xff]
      %v694 = vld [vmem:[%s683 + $0x50] sm:$0xff]
      %v695 = vld [vmem:[%s683 + $0x58] sm:$0xff]
      %v696 = vld [vmem:[%s683 + $0x60] sm:$0xff]
      %v697 = vld [vmem:[%s683 + $0x68] sm:$0xff]
      %v698 = vld [vmem:[%s683 + $0x70] sm:$0xff]
      %v699 = vld [vmem:[%s683 + $0x78] sm:$0xff]
      %700 = vmatpush.msra.mxu0 %v699
      %701 = vmatpush.msra.mxu0 %v698
      %702 = vmatpush.msra.mxu0 %v697
      %703 = vmatpush.msra.mxu0 %v696
      %704 = vmatpush.msra.mxu0 %v695
      %705 = vmatpush.msra.mxu0 %v694
      %706 = vmatpush.msra.mxu0 %v693
      %707 = vmatpush.msra.mxu0 %v692
      %708 = vmatpush.msra.mxu0 %v691
      %709 = vmatpush.msra.mxu0 %v690
      %710 = vmatpush.msra.mxu0 %v689
      %711 = vmatpush.msra.mxu0 %v688
      %712 = vmatpush.msra.mxu0 %v687
      %713 = vmatpush.msra.mxu0 %v686
      %714 = vmatpush.msra.mxu0 %v685
      %715 = vmatpush.msra.mxu0 %v684
      %716 = vmatmul.f32.gmra.mxu0 %v641
      %v717 = vpop.f32.mrf.mxu0
      %v718 = vadd.f32 0.0, %v717
      %719 = vmatmul.f32.gmra.mxu0 %v642
      %v720 = vpop.f32.mrf.mxu0
      %v721 = vadd.f32 0.0, %v720
      %722 = vdwg.mxu0
      %723 = vst [vmem:[%s386] sm:$0xff] %v678
      %724 = vst [vmem:[%s386 + $0x8] sm:$0xff] %v681
      %725 = vst [vmem:[%s391] sm:$0xff] %v718
      %726 = vst [vmem:[%s391 + $0x8] sm:$0xff] %v721
      %p727 = scmp.lt.s32.totalorder %s19, 1
      %s728 = scalar_select %p727, %s19, 1
      %s729 = smul.addr %s728, 2
      %s730 = smul.addr %s729, 8
      %s731 = scalar_lea.vmem %s6, %s730
      %p732 = scmp.lt.s32.totalorder %s19, 1
      %s733 = scalar_select %p732, %s19, 1
      %s734 = smul.addr %s733, 2
      %s735 = smul.addr %s734, 8
      %s736 = scalar_lea.vmem %s7, %s735
      // Predicated region
      $region45: #{_equivariant_mlp_forward_impl.1} parent=43 // pred_check
        %p737 = pneg %p193
      $region46: #{_equivariant_mlp_forward_impl.1} parent=43 // pred_check_branch
        %739 = sbr.rel (%p737) target = $region48
      $region47: #{_equivariant_mlp_forward_impl.1} parent=43 // pred_region
        _
      $region48: #{_equivariant_mlp_forward_impl.1} parent=43 // pred_fallthru
        _
      // Predicated region
      $region49: #{_equivariant_mlp_forward_impl.1} parent=43 // pred_check
        %p740 = pneg %p219
      $region50: #{_equivariant_mlp_forward_impl.1} parent=43 // pred_check_branch
        %742 = sbr.rel (%p740) target = $region52
      $region51: #{_equivariant_mlp_forward_impl.1} parent=43 // pred_region
        _
      $region52: #{_equivariant_mlp_forward_impl.1} parent=43 // pred_fallthru
        _
    $region44: #{_equivariant_mlp_forward_impl.1} parent=5 // pred_fallthru
      _
    %p743 = scmp.le.s32.totalorder 2, %s14
    // Predicated region
    $region53: #{_equivariant_mlp_forward_impl.1} parent=5 // pred_check
      %p744 = pneg %p743
    $region54: #{_equivariant_mlp_forward_impl.1} parent=5 // pred_check_branch
      %746 = sbr.rel (%p744) target = $region56
    $region55: #{_equivariant_mlp_forward_impl.1} parent=5 // pred_region
      %s747 = ssub.s32 %s14, 2
      // Predicated region
      $region57: #{_equivariant_mlp_forward_impl.1} parent=55 // pred_check
        %p748 = pneg %p199
      $region58: #{_equivariant_mlp_forward_impl.1} parent=55 // pred_check_branch
        %750 = sbr.rel (%p748) target = $region60
      $region59: #{_equivariant_mlp_forward_impl.1} parent=55 // pred_region
        %p751 = scmp.lt.s32.totalorder %s20, 1
        %s752 = scalar_select %p751, %s20, 1
        %s753 = smul.addr %s752, 2
        %s754 = smul.addr %s753, 8
        %s755 = scalar_lea.vmem %s6, %s754
      $region60: #{_equivariant_mlp_forward_impl.1} parent=55 // pred_fallthru
        _
      // Predicated region
      $region61: #{_equivariant_mlp_forward_impl.1} parent=55 // pred_check
        %p756 = pneg %p225
      $region62: #{_equivariant_mlp_forward_impl.1} parent=55 // pred_check_branch
        %758 = sbr.rel (%p756) target = $region64
      $region63: #{_equivariant_mlp_forward_impl.1} parent=55 // pred_region
        %p759 = scmp.lt.s32.totalorder %s20, 1
        %s760 = scalar_select %p759, %s20, 1
        %s761 = smul.addr %s760, 2
        %s762 = smul.addr %s761, 8
        %s763 = scalar_lea.vmem %s7, %s762
      $region64: #{_equivariant_mlp_forward_impl.1} parent=55 // pred_fallthru
        _
    $region56: #{_equivariant_mlp_forward_impl.1} parent=5 // pred_fallthru
      _
  $region6: #{_equivariant_mlp_forward_impl.1} parent=0 // loop_footer
    %s18 = sadd.s32 1, %s14
  $region7: #{_equivariant_mlp_forward_impl.1} parent=0 // loop_footer_branch
    %13 = sbr.rel target = $region3
  $region8: #{_equivariant_mlp_forward_impl.1} parent=0 // loop_exit
    _

</llo_original>
